<compile_context>
chip_gen: v7x
topology: tpu7x:2x2x1
jax: 0.10.0
libtpu: 0.0.40
codegen_flags: <defaults>
</compile_context>

<pallas_src>
import jax
import jax.numpy as jnp
from jax.experimental import pallas as pl
from jax.experimental.pallas import tpu as pltpu


def attention_kernel(x_ref, w_ref, o_ref):
    # x_ref: (Bblk, T, D) VMEM    w_ref: (1, D) VMEM    o_ref: (Bblk, D) VMEM
    x = x_ref[...].astype(jnp.float32)                    # (Bb, T, D)
    w = w_ref[...].astype(jnp.float32)                    # (1, D)

    # Scores in the native layout: lane reduce over D, keep the singleton lane axis
    # so T never moves off the sublane axis (no relayouts).
    scores = jnp.sum(x * w, axis=-1, keepdims=True)       # (Bb, T, 1)

    # Numerically stable softmax over the time (sublane) axis.
    m = jnp.max(scores, axis=1, keepdims=True)            # (Bb, 1, 1)
    e = jnp.exp(scores - m)                                # (Bb, T, 1)
    denom = jnp.sum(e, axis=1, keepdims=True)              # (Bb, 1, 1)

    # Unnormalized context: broadcast e over lanes, sublane-reduce over T.
    ctx = jnp.sum(e * x, axis=1)                           # (Bb, D)

    # Normalize once per row.  approx=False keeps full precision for the 1e-5 check.
    inv = pl.reciprocal(denom[:, 0, :], approx=False)      # (Bb, 1)
    o_ref[...] = (ctx * inv).astype(o_ref.dtype)


def attention_forward(lstm_out, w_row, *, batch_block=128):
    """lstm_out: (B, T, D), w_row: (1, D) (PyTorch Linear weight) -> (B, D).

    The Linear bias is intentionally not an argument: it is mathematically dead
    under the softmax (shift invariance), so the output is identical without it.
    """
    B, T, D = lstm_out.shape
    out_shape = jax.ShapeDtypeStruct((B, D), lstm_out.dtype)

    if B > batch_block and B % batch_block == 0:
        # Gridded path: tile the batch axis, mark it "parallel" so v7x's two
        # TensorCores split the work (harmless on single-TC v5e/v6e).
        return pl.pallas_call(
            attention_kernel,
            out_shape=out_shape,
            grid=(B // batch_block,),
            in_specs=[
                pl.BlockSpec((batch_block, T, D), lambda i: (i, 0, 0)),
                pl.BlockSpec((1, D), lambda i: (0, 0)),
            ],
            out_specs=pl.BlockSpec((batch_block, D), lambda i: (i, 0)),
            compiler_params=pltpu.CompilerParams(
                dimension_semantics=("parallel",)),
        )(lstm_out, w_row)

    # Single-shot path: whole problem resident in VMEM, no grid, no pipeline
    # machinery — fixed overhead is the wall clock at this size.
    return pl.pallas_call(
        attention_kernel,
        out_shape=out_shape,
        in_specs=[
            pl.BlockSpec(memory_space=pltpu.MemorySpace.VMEM),
            pl.BlockSpec(memory_space=pltpu.MemorySpace.VMEM),
        ],
        out_specs=pl.BlockSpec(memory_space=pltpu.MemorySpace.VMEM),
    )(lstm_out, w_row)


def reference_forward(lstm_out, w_row, b):
    # Pure-JAX reference reproducing the PyTorch module's semantics (bias included).
    scores = jnp.einsum("btd,od->bto", lstm_out, w_row) + b[0]    # (B, T, 1)
    attn = jax.nn.softmax(scores, axis=1)                         # (B, T, 1)
    return jnp.sum(attn * lstm_out, axis=1)                       # (B, D)


if __name__ == "__main__":
    lstm_hidden_size = 16
    T = 8
    D = lstm_hidden_size * 2  # 32

    key = jax.random.PRNGKey(0)
    k_x, k_w, k_b, k_x2 = jax.random.split(key, 4)

    # nn.Linear(2H, 1): weight (1, 2H), bias (1,)
    w_row = jax.random.normal(k_w, (1, D), dtype=jnp.float32) * 0.1
    b = jax.random.normal(k_b, (1,), dtype=jnp.float32) * 0.1

    # --- Small case: single-shot (grid-less) path ---
    B = 2
    lstm_out = jax.random.normal(k_x, (B, T, D), dtype=jnp.float32)
    out = jax.block_until_ready(attention_forward(lstm_out, w_row))
    ref = reference_forward(lstm_out, w_row, b)
    assert out.shape == (B, D)
    assert jnp.allclose(out, ref, atol=1e-5, rtol=1e-5), "mismatch vs reference (small)"

    # --- Large-batch case: gridded "parallel" path (exercises both v7x TCs) ---
    B2 = 256
    lstm_out2 = jax.random.normal(k_x2, (B2, T, D), dtype=jnp.float32)
    out2 = jax.block_until_ready(attention_forward(lstm_out2, w_row))
    ref2 = reference_forward(lstm_out2, w_row, b)
    assert out2.shape == (B2, D)
    assert jnp.allclose(out2, ref2, atol=1e-5, rtol=1e-5), "mismatch vs reference (batched)"

    print("KERNEL_OK")
</pallas_src>

<mosaic_0001>
module attributes {stable_mosaic.version = 11 : i64} {
  func.func @attention_kernel(%arg0: memref<2x8x32xf32, #tpu.memory_space<vmem>>, %arg1: memref<1x32xf32, #tpu.memory_space<vmem>>, %arg2: memref<2x32xf32, #tpu.memory_space<vmem>>) attributes {dimension_semantics = [], scalar_prefetch = 0 : i64, scratch_operands = 0 : i64, tpu.core_type = #tpu.core_type<tc>} {
    %c0 = arith.constant 0 : index
    %c0_0 = arith.constant 0 : index
    %c0_1 = arith.constant 0 : index
    %0 = vector.load %arg0[%c0, %c0_0, %c0_1] : memref<2x8x32xf32, #tpu.memory_space<vmem>>, vector<2x8x32xf32>
    %c0_2 = arith.constant 0 : index
    %c0_3 = arith.constant 0 : index
    %1 = vector.load %arg1[%c0_2, %c0_3] : memref<1x32xf32, #tpu.memory_space<vmem>>, vector<1x32xf32>
    %2 = vector.shape_cast %1 : vector<1x32xf32> to vector<1x1x32xf32>
    %3 = vector.broadcast %2 : vector<1x1x32xf32> to vector<2x8x32xf32>
    %4 = arith.mulf %0, %3 : vector<2x8x32xf32>
    %cst = arith.constant dense<0.000000e+00> : vector<2x8xf32>
    %5 = vector.multi_reduction <add>, %4, %cst [2] : vector<2x8x32xf32> to vector<2x8xf32>
    %6 = vector.shape_cast %5 : vector<2x8xf32> to vector<2x8x1xf32>
    %cst_4 = arith.constant dense<0xFF800000> : vector<2x1xf32>
    %7 = vector.multi_reduction <maximumf>, %6, %cst_4 [1] : vector<2x8x1xf32> to vector<2x1xf32>
    %8 = vector.shape_cast %7 : vector<2x1xf32> to vector<2x1x1xf32>
    %9 = vector.broadcast %8 : vector<2x1x1xf32> to vector<2x8x1xf32>
    %10 = arith.subf %6, %9 : vector<2x8x1xf32>
    %11 = math.exp %10 : vector<2x8x1xf32>
    %cst_5 = arith.constant dense<0.000000e+00> : vector<2x1xf32>
    %12 = vector.multi_reduction <add>, %11, %cst_5 [1] : vector<2x8x1xf32> to vector<2x1xf32>
    %13 = vector.shape_cast %12 : vector<2x1xf32> to vector<2x1x1xf32>
    %14 = vector.broadcast %11 : vector<2x8x1xf32> to vector<2x8x32xf32>
    %15 = arith.mulf %14, %0 : vector<2x8x32xf32>
    %cst_6 = arith.constant dense<0.000000e+00> : vector<2x32xf32>
    %16 = vector.multi_reduction <add>, %15, %cst_6 [1] : vector<2x8x32xf32> to vector<2x32xf32>
    %17 = vector.shape_cast %13 : vector<2x1x1xf32> to vector<2x1xf32>
    %18 = tpu.reciprocal %17 : vector<2x1xf32> -> vector<2x1xf32>
    %19 = vector.broadcast %18 : vector<2x1xf32> to vector<2x32xf32>
    %20 = arith.mulf %16, %19 : vector<2x32xf32>
    %c0_7 = arith.constant 0 : index
    %c0_8 = arith.constant 0 : index
    %21 = vector.load %arg2[%c0_7, %c0_8] : memref<2x32xf32, #tpu.memory_space<vmem>>, vector<2x32xf32>
    tpu.vector_store %arg2[%c0_7, %c0_8], %20 {strides = array<i32>} : memref<2x32xf32, #tpu.memory_space<vmem>>, vector<2x32xf32>,
    return
  }
}

</mosaic_0001>

<llo_original>
// kernel: tpu_custom_call.1
$region0: #{tpu_custom_call.1}
  #allocation0 [shape = 'u32[]', space=smem, size = 0x4, offset = 0x4, fixed_abs, tag = 'smem constant byte address 0x4 - core index']
  #allocation1 [shape = 'u32[144,128]{1,0:T(1,128)}', space=vmem, size = 0x12000, scoped, tag = 'internal scratch']
  %s0 = inlined_call_operand.hbm [shape: f32[2,8,32], index: 0, kind: input, shape index: {}]
  %s1 = inlined_call_operand.vmem [shape: f32[1,32], index: 1, kind: input, shape index: {}]
  %s2 = inlined_call_operand.hbm [shape: f32[2,32], index: 2, kind: output, shape index: {}]
  %s3 = sld [smem:[#allocation0]]
  $region22: #{tpu_custom_call.1} parent=0
    _
  %s5 = ssub.s32 1, %s3
  %s6 = scalar_select 0, %s5, %s3
  $region1: #{tpu_custom_call.1} parent=0
    #allocation2 [shape = 'u8[8192]{0}', space=vmem, size = 0x2000, scoped, tag = 'input window, operand 0, single buffered']
    #allocation3 [shape = 's32[1]{0}', space=sflag, size = 0x4, scoped, tag = 'scoped memory for tpu_custom_call.1']
    #allocation4 [shape = 's32[1]{0}', space=sflag, size = 0x4, scoped, tag = 'scoped memory for tpu_custom_call.1']
    #allocation5 [shape = 'u8[1024]{0}', space=vmem, size = 0x400, scoped, tag = 'output window, operand 0, single buffered']
    %7 = vsyncpa [#allocation3], 0
    %8 = vsyncpa [#allocation4], 0
    // Predicated region
    $region2: #{tpu_custom_call.1} parent=1 // pred_check
      _
    $region3: #{tpu_custom_call.1} parent=1 // pred_check_branch
      %10 = sbr.rel (0) target = $region5
    $region4: #{tpu_custom_call.1} parent=1 // pred_region
      %s12 = ssub.s32 256, 256
      %13 = vsyncadd [#allocation3], %s12
      %s14 = sshll.u32 [#allocation2], 4
      %s15 = int_to_ptr.vmem [resolvable:$true] %s14
      %20 = dma.hbm_to_vmem [thread:$0]  %s0, 256, %s15, [#allocation3], 128, 128, 8
    $region5: #{tpu_custom_call.1} parent=1 // pred_fallthru
      _
    // Predicated region
    $region6: #{tpu_custom_call.1} parent=1 // pred_check
      _
    $region7: #{tpu_custom_call.1} parent=1 // pred_check_branch
      %22 = sbr.rel (0) target = $region9
    $region8: #{tpu_custom_call.1} parent=1 // pred_region
      _
    $region9: #{tpu_custom_call.1} parent=1 // pred_fallthru
      _
    // Predicated region
    $region10: #{tpu_custom_call.1} parent=1 // pred_check
      _
    $region11: #{tpu_custom_call.1} parent=1 // pred_check_branch
      %24 = sbr.rel (0) target = $region13
    $region12: #{tpu_custom_call.1} parent=1 // pred_region
      %25 = dma.done [#allocation3], 256
    $region13: #{tpu_custom_call.1} parent=1 // pred_fallthru
      _
    %v26 = vld [vmem:[#allocation2] sm:$0xff]
    %v27 = vld [vmem:[#allocation2 + $0x8] sm:$0xff]
    %v28 = vld [vmem:[%s1] sm:$0x1]
    %v30 = vlaneseq
    %v31 = vshrl.u32 %v30, 7
    %v32 = vsub.s32 0, %v31
    %v33 = vrot.slane %v28, %v32
    %v35 = vmul.f32 %v26, %v33
    %v36 = vmul.f32 %v27, %v33
    %vm37 = vcmask 261120
    %v38 = vsel %vm37, %v35, 0.0
    %39 = vadd.xlane.f32.xlu0 %v38
    %v40 = vpop.xlane.xlu0 %39
    %v41 = vsel %vm37, %v36, 0.0
    %42 = vadd.xlane.f32.xlu0 %v41
    %v43 = vpop.xlane.xlu0 %42
    %v44 = vrot.slane %v40, 4
    %v45 = vmax.f32 %v40, %v44
    %v46 = vrot.slane %v45, 2
    %v47 = vmax.f32 %v45, %v46
    %v48 = vrot.slane %v47, 1
    %v49 = vmax.f32 %v47, %v48
    %v50 = vrot.slane %v43, 4
    %v51 = vmax.f32 %v43, %v50
    %v52 = vrot.slane %v51, 2
    %v53 = vmax.f32 %v51, %v52
    %v54 = vrot.slane %v53, 1
    %v55 = vmax.f32 %v53, %v54
    %v56 = vsub.f32 %v40, %v49
    %v57 = vsub.f32 %v43, %v55
    %v58 = vmul.f32 %v56, 1.442695
    %v59 = vpow.pop %v58
    %v60 = vmul.f32 %v57, 1.442695
    %v61 = vpow.pop %v60
    %v62 = vrot.slane %v59, 4
    %v63 = vadd.f32 %v59, %v62
    %v64 = vrot.slane %v63, 2
    %v65 = vadd.f32 %v63, %v64
    %v66 = vrot.slane %v65, 1
    %v67 = vadd.f32 %v65, %v66
    %v68 = vrot.slane %v61, 4
    %v69 = vadd.f32 %v61, %v68
    %v70 = vrot.slane %v69, 2
    %v71 = vadd.f32 %v69, %v70
    %v72 = vrot.slane %v71, 1
    %v73 = vadd.f32 %v71, %v72
    %v74 = vmul.f32 %v59, %v26
    %v75 = vmul.f32 %v61, %v27
    %v76 = vsel %vm37, %v74, 0.0
    %v77 = vrot.slane %v76, 4
    %v78 = vadd.f32 %v76, %v77
    %v79 = vrot.slane %v78, 2
    %v80 = vadd.f32 %v78, %v79
    %v81 = vrot.slane %v80, 1
    %v82 = vadd.f32 %v80, %v81
    %v83 = vsel %vm37, %v75, 0.0
    %v84 = vrot.slane %v83, 4
    %v85 = vadd.f32 %v83, %v84
    %v86 = vrot.slane %v85, 2
    %v87 = vadd.f32 %v85, %v86
    %v88 = vrot.slane %v87, 1
    %v89 = vadd.f32 %v87, %v88
    %v90 = vrcp.pop %v67
    %v91 = vrcp.pop %v73
    %v92 = vmul.f32 %v82, %v90
    %v93 = vmul.f32 %v89, %v91
    %vm96 = vcmask 1041409
    %v97 = vsel %vm96, %v93, %v92
    %vm99 = vcmask 254976
    %100 = vst.msk [vmem:[#allocation5] sm:$0x3] %vm99, %v97
    // Predicated region
    $region14: #{tpu_custom_call.1} parent=1 // pred_check
      _
    $region15: #{tpu_custom_call.1} parent=1 // pred_check_branch
      %102 = sbr.rel (0) target = $region17
    $region16: #{tpu_custom_call.1} parent=1 // pred_region
      %s104 = ssub.s32 32, 32
      %105 = vsyncadd [#allocation4], %s104
      %s107 = sshll.u32 [#allocation5], 4
      %s108 = int_to_ptr.vmem [resolvable:$true] %s107
      %110 = dma.vmem_to_hbm [thread:$0]  %s108, 32, %s2, [#allocation4]
    $region17: #{tpu_custom_call.1} parent=1 // pred_fallthru
      _
    // Predicated region
    $region18: #{tpu_custom_call.1} parent=1 // pred_check
      _
    $region19: #{tpu_custom_call.1} parent=1 // pred_check_branch
      %112 = sbr.rel (0) target = $region21
    $region20: #{tpu_custom_call.1} parent=1 // pred_region
      %113 = dma.done [#allocation4], 32
    $region21: #{tpu_custom_call.1} parent=1 // pred_fallthru
      _
    %114 = vsyncpa [#allocation3], 1
    %115 = vsyncpa [#allocation4], 1

</llo_original>
